<compile_context>
chip_gen: v5e
topology: v5e:2x2
jax: 0.10.0
libtpu: 0.0.40
codegen_flags: <defaults>
</compile_context>

<pallas_src>
import functools

import jax
import jax.numpy as jnp
from jax.experimental import pallas as pl
from jax.experimental.pallas import tpu as pltpu


def _round_up(x, m):
    return ((x + m - 1) // m) * m


# --------------------------------------------------------------------------- #
# Kernel
# --------------------------------------------------------------------------- #
def feedforward_kernel(x_ref, w1_ref, b1_ref, w2_ref, b2_ref,
                       w3_ref, b3_ref, w4_ref, b4_ref, o_ref):
    """One batch tile of the fused MLP. bf16 MXU inputs, f32 accumulation."""
    x = x_ref[...].astype(jnp.bfloat16)

    # Layers 1-2: dot -> +bias -> ReLU -> bf16, fused so the bf16 operand of the
    # next dot is produced in a single pass (no extra f32 activation round-trip).
    h = jnp.maximum(
        jnp.dot(x, w1_ref[...], preferred_element_type=jnp.float32) + b1_ref[...],
        0.0).astype(jnp.bfloat16)
    h = jnp.maximum(
        jnp.dot(h, w2_ref[...], preferred_element_type=jnp.float32) + b2_ref[...],
        0.0).astype(jnp.bfloat16)
    # Layer 3 output stays f32: it feeds the VPU multiply of the final layer.
    h = jnp.maximum(
        jnp.dot(h, w3_ref[...], preferred_element_type=jnp.float32) + b3_ref[...],
        0.0)

    # Final layer has a single output unit: VPU multiply + XLU lane reduction
    # instead of an N=1 MXU matmul.  Broadcasting the (tb,) row-sum against the
    # (1,1) bias yields a lane-dense (1, tb) row -> unmasked, contiguous store.
    row = jnp.sum(h * w4_ref[...].astype(jnp.float32), axis=-1) + b4_ref[...]
    o_ref[0] = jax.nn.sigmoid(row).astype(o_ref.dtype)


# --------------------------------------------------------------------------- #
# One-time parameter preparation (hoisted out of the per-call path)
# --------------------------------------------------------------------------- #
def prepare_params(params):
    """Lane-pad hidden dims to 128 and cast weights to bf16 — done ONCE.

    Padded hidden units are provably inert: padded weight cols are 0, padded
    bias entries are 0 -> ReLU(0)=0 -> zero weight rows downstream, so the math
    is exactly unchanged.
    """
    H1 = params["w1"].shape[1]
    H2 = params["w2"].shape[1]
    H3 = params["w3"].shape[1]
    H1p, H2p, H3p = (_round_up(h, 128) for h in (H1, H2, H3))
    return {
        "w1": jnp.pad(params["w1"], ((0, 0), (0, H1p - H1))).astype(jnp.bfloat16),
        "w2": jnp.pad(params["w2"], ((0, H1p - H1), (0, H2p - H2))).astype(jnp.bfloat16),
        "w3": jnp.pad(params["w3"], ((0, H2p - H2), (0, H3p - H3))).astype(jnp.bfloat16),
        "w4": jnp.pad(params["w4"].reshape(1, H3),
                      ((0, 0), (0, H3p - H3))).astype(jnp.bfloat16),
        "b1": jnp.pad(params["b1"], ((0, 0), (0, H1p - H1))),
        "b2": jnp.pad(params["b2"], ((0, 0), (0, H2p - H2))),
        "b3": jnp.pad(params["b3"], ((0, 0), (0, H3p - H3))),
        "b4": params["b4"],                                    # (1, 1) f32
    }


def _xla_forward(x, prep):
    """Plain-XLA path (same bf16 math) for batches too small to amortize the
    Pallas weight DMA / launch cost."""
    h = x.astype(jnp.bfloat16)
    h = jnp.maximum(jnp.dot(h, prep["w1"], preferred_element_type=jnp.float32)
                    + prep["b1"], 0.0).astype(jnp.bfloat16)
    h = jnp.maximum(jnp.dot(h, prep["w2"], preferred_element_type=jnp.float32)
                    + prep["b2"], 0.0).astype(jnp.bfloat16)
    h = jnp.maximum(jnp.dot(h, prep["w3"], preferred_element_type=jnp.float32)
                    + prep["b3"], 0.0)
    logits = (jnp.sum(h * prep["w4"].astype(jnp.float32), axis=-1, keepdims=True)
              + prep["b4"])
    return jax.nn.sigmoid(logits).astype(x.dtype)


# --------------------------------------------------------------------------- #
# Pallas wrapper
# --------------------------------------------------------------------------- #
@functools.partial(jax.jit, static_argnames=("block_b", "min_pallas_rows"))
def feedforward(x, prep, *, block_b=1024, min_pallas_rows=0):
    """x: (B, P) f32.  prep: output of prepare_params (pre-padded bf16 weights)."""
    B, P = x.shape
    if B < min_pallas_rows:        # production would set ~128; 0 here so the
        return _xla_forward(x, prep)  # kernel path is always exercised in tests

    # ---- batch tile selection ----------------------------------------------
    if B <= 256:
        tb = B                     # single tile; fixed launch cost dominates anyway
    else:
        # >=2 grid steps as soon as B > 256 (both v7x TensorCores busy), and
        # target ~4 steps (>=2 per core) so DMA stays overlapped with compute.
        # Cap at block_b (default 1024 rows ~ 4 MiB VMEM incl. double buffers:
        # safe on v5e's 16 MiB scoped default and v7x's 64 MiB physical VMEM).
        tb = min(block_b, max(256, _round_up(pl.cdiv(B, 4), 128)))
    num_tiles = pl.cdiv(B, tb)

    def full(arr):
        # Small weights/biases: whole array, same block every step (fetched once).
        # NOTE: pipeline_mode=pl.Buffered(1) would halve their VMEM buffering
        # (~70 KiB) but is left at the default for portability.
        return pl.BlockSpec(arr.shape, lambda i: (0,) * arr.ndim)

    out = pl.pallas_call(
        feedforward_kernel,
        # Lane-dense output: one (1, tb) row per grid step instead of a (tb, 1)
        # column -> unmasked stores and a contiguous writeback DMA.
        out_shape=jax.ShapeDtypeStruct((num_tiles, 1, tb), x.dtype),
        grid_spec=pltpu.PrefetchScalarGridSpec(
            num_scalar_prefetch=0,
            grid=(num_tiles,),
            in_specs=[
                pl.BlockSpec((tb, P), lambda i: (i, 0)),   # x tile over batch
                full(prep["w1"]), full(prep["b1"]),
                full(prep["w2"]), full(prep["b2"]),
                full(prep["w3"]), full(prep["b3"]),
                full(prep["w4"]), full(prep["b4"]),
            ],
            out_specs=pl.BlockSpec((1, 1, tb), lambda i: (i, 0, 0)),
        ),
        compiler_params=pltpu.CompilerParams(
            dimension_semantics=("parallel",)),
    )(x, prep["w1"], prep["b1"], prep["w2"], prep["b2"],
      prep["w3"], prep["b3"], prep["w4"], prep["b4"])

    # (num_tiles, 1, tb) -> (B, 1); any boundary-padded tail rows (B not a
    # multiple of tb) are dropped here, so padded garbage never escapes.
    return out.reshape(num_tiles * tb, 1)[:B]


# --------------------------------------------------------------------------- #
# Init + references
# --------------------------------------------------------------------------- #
def init_params(key, covar_size):
    """torch.nn.Linear-style init (U[-1/sqrt(in), 1/sqrt(in)]).

    Weights stored (in, out) (transposed vs torch's (out, in)) so the kernel
    computes x @ W directly.
    """
    dims = [covar_size, 6 * covar_size, 4 * covar_size, 2 * covar_size, 1]
    params = {}
    for li in range(4):
        fan_in, fan_out = dims[li], dims[li + 1]
        key, kw, kb = jax.random.split(key, 3)
        bound = 1.0 / jnp.sqrt(fan_in)
        params[f"w{li + 1}"] = jax.random.uniform(
            kw, (fan_in, fan_out), jnp.float32, -bound, bound)
        params[f"b{li + 1}"] = jax.random.uniform(
            kb, (1, fan_out), jnp.float32, -bound, bound)
    return params


def reference(x, params):
    """Pure-f32 reference matching the torch module's math."""
    h = x
    for li in range(1, 4):
        h = jnp.maximum(h @ params[f"w{li}"] + params[f"b{li}"], 0.0)
    return jax.nn.sigmoid(h @ params["w4"] + params["b4"])


def reference_bf16(x, params):
    """Mirror the kernel's arithmetic (bf16 matmul inputs, f32 accumulation)."""
    bf = lambda a: a.astype(jnp.bfloat16).astype(jnp.float32)
    h = bf(x)
    for li in range(1, 4):
        h = jnp.maximum(
            jnp.dot(bf(h), bf(params[f"w{li}"]),
                    preferred_element_type=jnp.float32) + params[f"b{li}"], 0.0)
    w4_row = bf(params["w4"]).reshape(1, -1)
    logits = jnp.sum(h * w4_row, axis=-1, keepdims=True) + params["b4"]
    return jax.nn.sigmoid(logits)


# --------------------------------------------------------------------------- #
if __name__ == "__main__":
    covar_size = 16   # P
    key = jax.random.PRNGKey(0)
    key, kp = jax.random.split(key)
    params = init_params(kp, covar_size)

    prep = prepare_params(params)       # one-time weight pad + bf16 cast
    jax.block_until_ready(prep)

    # batch=8:   single-tile path
    # batch=384: 2 parallel 256-row tiles, trailing block partially valid
    #            (non-divisible-B boundary padding is dropped in the wrapper)
    # batch=1024: 4 parallel 256-row tiles (>=2 per v7x TensorCore)
    for batch in (8, 384, 1024):
        key, kx = jax.random.split(key)
        x = jax.random.normal(kx, (batch, covar_size), jnp.float32)

        y = feedforward(x, prep)
        jax.block_until_ready(y)
        assert y.shape == (batch, 1)

        y_bf = reference_bf16(x, params)   # same arithmetic as the kernel
        y_f32 = reference(x, params)       # torch-equivalent f32 math
        err_bf = float(jnp.max(jnp.abs(y - y_bf)))
        err_f32 = float(jnp.max(jnp.abs(y - y_f32)))
        assert err_bf < 2e-3, f"B={batch}: kernel vs bf16-matched ref err {err_bf}"
        assert err_f32 < 5e-2, f"B={batch}: kernel vs f32 ref err {err_f32}"

    print("KERNEL_OK")
</pallas_src>

<mosaic_0001>
module attributes {stable_mosaic.version = 11 : i64} {
  func.func @feedforward_kernel(%arg0: i32, %arg1: memref<8x16xf32, #tpu.memory_space<vmem>>, %arg2: memref<16x128xbf16, #tpu.memory_space<vmem>>, %arg3: memref<1x128xf32, #tpu.memory_space<vmem>>, %arg4: memref<128x128xbf16, #tpu.memory_space<vmem>>, %arg5: memref<1x128xf32, #tpu.memory_space<vmem>>, %arg6: memref<128x128xbf16, #tpu.memory_space<vmem>>, %arg7: memref<1x128xf32, #tpu.memory_space<vmem>>, %arg8: memref<1x128xbf16, #tpu.memory_space<vmem>>, %arg9: memref<1x1xf32, #tpu.memory_space<vmem>>, %arg10: memref<1x1x8xf32, #tpu.memory_space<vmem>>) attributes {dimension_semantics = [#tpu.dimension_semantics<parallel>], iteration_bounds = array<i64: 1>, scalar_prefetch = 0 : i64, scratch_operands = 0 : i64, tpu.core_type = #tpu.core_type<tc>, window_params = [{transform_indices = @transform_0, window_bounds = array<i64: 8, 16>}, {pipeline_mode = #tpu.pipeline_mode<synchronous>, transform_indices = @transform_1, window_bounds = array<i64: 16, 128>}, {pipeline_mode = #tpu.pipeline_mode<synchronous>, transform_indices = @transform_2, window_bounds = array<i64: 1, 128>}, {pipeline_mode = #tpu.pipeline_mode<synchronous>, transform_indices = @transform_3, window_bounds = array<i64: 128, 128>}, {pipeline_mode = #tpu.pipeline_mode<synchronous>, transform_indices = @transform_4, window_bounds = array<i64: 1, 128>}, {pipeline_mode = #tpu.pipeline_mode<synchronous>, transform_indices = @transform_5, window_bounds = array<i64: 128, 128>}, {pipeline_mode = #tpu.pipeline_mode<synchronous>, transform_indices = @transform_6, window_bounds = array<i64: 1, 128>}, {pipeline_mode = #tpu.pipeline_mode<synchronous>, transform_indices = @transform_7, window_bounds = array<i64: 1, 128>}, {pipeline_mode = #tpu.pipeline_mode<synchronous>, transform_indices = @transform_8, window_bounds = array<i64: 1, 1>}, {transform_indices = @transform_9, window_bounds = array<i64: 1, 1, 8>}]} {
    %c0 = arith.constant 0 : index
    %c0_0 = arith.constant 0 : index
    %0 = vector.load %arg1[%c0, %c0_0] : memref<8x16xf32, #tpu.memory_space<vmem>>, vector<8x16xf32>
    %1 = arith.truncf %0 : vector<8x16xf32> to vector<8x16xbf16>
    %c0_1 = arith.constant 0 : index
    %c0_2 = arith.constant 0 : index
    %2 = vector.load %arg2[%c0_1, %c0_2] : memref<16x128xbf16, #tpu.memory_space<vmem>>, vector<16x128xbf16>
    %cst = arith.constant dense<0.000000e+00> : vector<8x128xf32>
    %3 = tpu.matmul %1, %2, %cst {dimension_numbers = #tpu.dot_dimension_numbers<[1], [0], [0], [1], [0, 0, 1, 1], [], []>} : vector<8x16xbf16>, vector<16x128xbf16>, vector<8x128xf32> -> vector<8x128xf32>
    %c0_3 = arith.constant 0 : index
    %c0_4 = arith.constant 0 : index
    %4 = vector.load %arg3[%c0_3, %c0_4] : memref<1x128xf32, #tpu.memory_space<vmem>>, vector<1x128xf32>
    %5 = vector.broadcast %4 : vector<1x128xf32> to vector<8x128xf32>
    %6 = arith.addf %3, %5 : vector<8x128xf32>
    %cst_5 = arith.constant 0.000000e+00 : f32
    %7 = vector.broadcast %cst_5 : f32 to vector<8x128xf32>
    %8 = arith.maximumf %6, %7 : vector<8x128xf32>
    %9 = arith.truncf %8 : vector<8x128xf32> to vector<8x128xbf16>
    %c0_6 = arith.constant 0 : index
    %c0_7 = arith.constant 0 : index
    %10 = vector.load %arg4[%c0_6, %c0_7] : memref<128x128xbf16, #tpu.memory_space<vmem>>, vector<128x128xbf16>
    %cst_8 = arith.constant dense<0.000000e+00> : vector<8x128xf32>
    %11 = tpu.matmul %9, %10, %cst_8 {dimension_numbers = #tpu.dot_dimension_numbers<[1], [0], [0], [1], [0, 0, 1, 1], [], []>} : vector<8x128xbf16>, vector<128x128xbf16>, vector<8x128xf32> -> vector<8x128xf32>
    %c0_9 = arith.constant 0 : index
    %c0_10 = arith.constant 0 : index
    %12 = vector.load %arg5[%c0_9, %c0_10] : memref<1x128xf32, #tpu.memory_space<vmem>>, vector<1x128xf32>
    %13 = vector.broadcast %12 : vector<1x128xf32> to vector<8x128xf32>
    %14 = arith.addf %11, %13 : vector<8x128xf32>
    %cst_11 = arith.constant 0.000000e+00 : f32
    %15 = vector.broadcast %cst_11 : f32 to vector<8x128xf32>
    %16 = arith.maximumf %14, %15 : vector<8x128xf32>
    %17 = arith.truncf %16 : vector<8x128xf32> to vector<8x128xbf16>
    %c0_12 = arith.constant 0 : index
    %c0_13 = arith.constant 0 : index
    %18 = vector.load %arg6[%c0_12, %c0_13] : memref<128x128xbf16, #tpu.memory_space<vmem>>, vector<128x128xbf16>
    %cst_14 = arith.constant dense<0.000000e+00> : vector<8x128xf32>
    %19 = tpu.matmul %17, %18, %cst_14 {dimension_numbers = #tpu.dot_dimension_numbers<[1], [0], [0], [1], [0, 0, 1, 1], [], []>} : vector<8x128xbf16>, vector<128x128xbf16>, vector<8x128xf32> -> vector<8x128xf32>
    %c0_15 = arith.constant 0 : index
    %c0_16 = arith.constant 0 : index
    %20 = vector.load %arg7[%c0_15, %c0_16] : memref<1x128xf32, #tpu.memory_space<vmem>>, vector<1x128xf32>
    %21 = vector.broadcast %20 : vector<1x128xf32> to vector<8x128xf32>
    %22 = arith.addf %19, %21 : vector<8x128xf32>
    %cst_17 = arith.constant 0.000000e+00 : f32
    %23 = vector.broadcast %cst_17 : f32 to vector<8x128xf32>
    %24 = arith.maximumf %22, %23 : vector<8x128xf32>
    %c0_18 = arith.constant 0 : index
    %c0_19 = arith.constant 0 : index
    %25 = vector.load %arg8[%c0_18, %c0_19] : memref<1x128xbf16, #tpu.memory_space<vmem>>, vector<1x128xbf16>
    %26 = arith.extf %25 : vector<1x128xbf16> to vector<1x128xf32>
    %27 = vector.broadcast %26 : vector<1x128xf32> to vector<8x128xf32>
    %28 = arith.mulf %24, %27 : vector<8x128xf32>
    %cst_20 = arith.constant dense<0.000000e+00> : vector<8xf32>
    %29 = vector.multi_reduction <add>, %28, %cst_20 [1] : vector<8x128xf32> to vector<8xf32>
    %c0_21 = arith.constant 0 : index
    %c0_22 = arith.constant 0 : index
    %30 = vector.load %arg9[%c0_21, %c0_22] : memref<1x1xf32, #tpu.memory_space<vmem>>, vector<1x1xf32>
    %31 = vector.shape_cast %29 : vector<8xf32> to vector<1x8xf32>
    %32 = vector.broadcast %30 : vector<1x1xf32> to vector<1x8xf32>
    %33 = arith.addf %31, %32 : vector<1x8xf32>
    %34 = arith.negf %33 : vector<1x8xf32>
    %35 = math.exp %34 : vector<1x8xf32>
    %cst_23 = arith.constant 1.000000e+00 : f32
    %36 = vector.broadcast %cst_23 : f32 to vector<1x8xf32>
    %37 = arith.addf %36, %35 : vector<1x8xf32>
    %38 = arith.divf %36, %37 : vector<1x8xf32>
    %c0_24 = arith.constant 0 : index
    %c0_25 = arith.constant 0 : index
    %c0_26 = arith.constant 0 : index
    %39 = vector.load %arg10[%c0_24, %c0_25, %c0_26] : memref<1x1x8xf32, #tpu.memory_space<vmem>>, vector<1x1x8xf32>
    %40 = vector.shape_cast %39 : vector<1x1x8xf32> to vector<1x8xf32>
    %41 = vector.shape_cast %38 : vector<1x8xf32> to vector<1x1x8xf32>
    tpu.vector_store %arg10[%c0_24, %c0_25, %c0_26], %41 {strides = array<i32>} : memref<1x1x8xf32, #tpu.memory_space<vmem>>, vector<1x1x8xf32>,
    return
  }
  func.func @transform_0(%arg0: i32) -> (i32, i32) {
    %c0_i32 = arith.constant 0 : i32
    %c0_i32_0 = arith.constant 0 : i32
    return %arg0, %c0_i32 : i32, i32
  }
  func.func @transform_1(%arg0: i32) -> (i32, i32) {
    %c0_i32 = arith.constant 0 : i32
    %c0_i32_0 = arith.constant 0 : i32
    %c0_i32_1 = arith.constant 0 : i32
    return %c0_i32, %c0_i32_0 : i32, i32
  }
  func.func @transform_2(%arg0: i32) -> (i32, i32) {
    %c0_i32 = arith.constant 0 : i32
    %c0_i32_0 = arith.constant 0 : i32
    %c0_i32_1 = arith.constant 0 : i32
    return %c0_i32, %c0_i32_0 : i32, i32
  }
  func.func @transform_3(%arg0: i32) -> (i32, i32) {
    %c0_i32 = arith.constant 0 : i32
    %c0_i32_0 = arith.constant 0 : i32
    %c0_i32_1 = arith.constant 0 : i32
    return %c0_i32, %c0_i32_0 : i32, i32
  }
  func.func @transform_4(%arg0: i32) -> (i32, i32) {
    %c0_i32 = arith.constant 0 : i32
    %c0_i32_0 = arith.constant 0 : i32
    %c0_i32_1 = arith.constant 0 : i32
    return %c0_i32, %c0_i32_0 : i32, i32
  }
  func.func @transform_5(%arg0: i32) -> (i32, i32) {
    %c0_i32 = arith.constant 0 : i32
    %c0_i32_0 = arith.constant 0 : i32
    %c0_i32_1 = arith.constant 0 : i32
    return %c0_i32, %c0_i32_0 : i32, i32
  }
  func.func @transform_6(%arg0: i32) -> (i32, i32) {
    %c0_i32 = arith.constant 0 : i32
    %c0_i32_0 = arith.constant 0 : i32
    %c0_i32_1 = arith.constant 0 : i32
    return %c0_i32, %c0_i32_0 : i32, i32
  }
  func.func @transform_7(%arg0: i32) -> (i32, i32) {
    %c0_i32 = arith.constant 0 : i32
    %c0_i32_0 = arith.constant 0 : i32
    %c0_i32_1 = arith.constant 0 : i32
    return %c0_i32, %c0_i32_0 : i32, i32
  }
  func.func @transform_8(%arg0: i32) -> (i32, i32) {
    %c0_i32 = arith.constant 0 : i32
    %c0_i32_0 = arith.constant 0 : i32
    %c0_i32_1 = arith.constant 0 : i32
    return %c0_i32, %c0_i32_0 : i32, i32
  }
  func.func @transform_9(%arg0: i32) -> (i32, i32, i32) {
    %c0_i32 = arith.constant 0 : i32
    %c0_i32_0 = arith.constant 0 : i32
    %c0_i32_1 = arith.constant 0 : i32
    return %arg0, %c0_i32, %c0_i32_0 : i32, i32, i32
  }
}

</mosaic_0001>

<llo_original>
// kernel: feedforward.1
$region0: #{feedforward.1}
  #allocation0 [shape = 'u32[]', space=smem, size = 0x4, offset = 0x4, fixed_abs, tag = 'smem constant byte address 0x4 - core index']
  #allocation1 [shape = 'u32[72,128]{1,0:T(1,128)}', space=vmem, size = 0x9000, scoped, tag = 'internal scratch']
  #allocation2 [shape = 'f32[1,1]{1,0:T(1,128)S(1)}', space=vmem, size = 0x200, scoped, tag = 'scoped memory for feedforward.1']
  %s0 = inlined_call_operand.hbm [shape: f32[8,16], index: 0, kind: input, shape index: {}]
  %s1 = inlined_call_operand.hbm [shape: bf16[16,128], index: 1, kind: input, shape index: {}]
  %s2 = inlined_call_operand.vmem [shape: f32[1,128], index: 2, kind: input, shape index: {}]
  %s3 = inlined_call_operand.hbm [shape: bf16[128,128], index: 3, kind: input, shape index: {}]
  %s4 = inlined_call_operand.vmem [shape: f32[1,128], index: 4, kind: input, shape index: {}]
  %s5 = inlined_call_operand.hbm [shape: bf16[128,128], index: 5, kind: input, shape index: {}]
  %s6 = inlined_call_operand.vmem [shape: f32[1,128], index: 6, kind: input, shape index: {}]
  %s7 = inlined_call_operand.vmem [shape: bf16[1,128], index: 7, kind: input, shape index: {}]
  %s8 = inlined_call_operand.<no memory space> [shape: f32[1,1], index: 8, kind: input, shape index: {}]
  %s9 = inlined_call_operand.hbm [shape: f32[1,1,8], index: 9, kind: output, shape index: {}]
  %s10 = sld [smem:[#allocation0]]
  $region62: #{feedforward.1} parent=0
    _
  %s12 = ssub.s32 1, %s10
  %s13 = scalar_select 0, %s12, %s10
  %v14 = vstv %s8
  %15 = vst [vmem:[#allocation2] sm:$0x1] %v14
  $region1: #{feedforward.1} parent=0
    #allocation3 [shape = 'u8[4096]{0}', space=vmem, size = 0x1000, scoped, tag = 'input window, operand 0, single buffered']
    #allocation4 [shape = 's32[1]{0}', space=sflag, size = 0x4, scoped, tag = 'scoped memory for feedforward.1']
    #allocation5 [shape = 's32[1]{0}', space=sflag, size = 0x4, scoped, tag = 'scoped memory for feedforward.1']
    #allocation6 [shape = 'u8[4096]{0}', space=vmem, size = 0x1000, scoped, tag = 'input window, operand 1, single buffered']
    #allocation7 [shape = 's32[1]{0}', space=sflag, size = 0x4, scoped, tag = 'scoped memory for feedforward.1']
    #allocation8 [shape = 'u8[32768]{0}', space=vmem, size = 0x8000, scoped, tag = 'input window, operand 3, single buffered']
    #allocation9 [shape = 'u8[32768]{0}', space=vmem, size = 0x8000, scoped, tag = 'input window, operand 5, single buffered']
    #allocation10 [shape = 's32[1]{0}', space=sflag, size = 0x4, scoped, tag = 'scoped memory for feedforward.1']
    #allocation11 [shape = 'u8[512]{0}', space=vmem, size = 0x400, scoped, tag = 'output window, operand 0, single buffered']
    %16 = vsyncpa [#allocation4], 0
    %17 = vsyncpa [#allocation7], 0
    %18 = vsyncpa [#allocation10], 0
    %19 = vsyncpa [#allocation5], 0
    // Predicated region
    $region2: #{feedforward.1} parent=1 // pred_check
      _
    $region3: #{feedforward.1} parent=1 // pred_check_branch
      %21 = sbr.rel (0) target = $region5
    $region4: #{feedforward.1} parent=1 // pred_region
      %23 = vsyncadd [#allocation4], 0
      %s25 = sshll.u32 %s0, 4
      %s26 = int_to_ptr.hbm [resolvable:$true] %s25
      %s27 = sshll.u32 [#allocation3], 4
      %s28 = int_to_ptr.vmem [resolvable:$true] %s27
      %30 = dma.hbm_to_vmem [thread:$0]  %s26, 128, %s28, [#allocation4]
    $region5: #{feedforward.1} parent=1 // pred_fallthru
      _
    // Predicated region
    $region6: #{feedforward.1} parent=1 // pred_check
      _
    $region7: #{feedforward.1} parent=1 // pred_check_branch
      %32 = sbr.rel (0) target = $region9
    $region8: #{feedforward.1} parent=1 // pred_region
      %34 = vsyncadd [#allocation7], 0
      %s35 = sshll.u32 %s1, 4
      %s36 = int_to_ptr.hbm [resolvable:$true] %s35
      %s37 = sshll.u32 [#allocation6], 4
      %s38 = int_to_ptr.vmem [resolvable:$true] %s37
      %43 = dma.hbm_to_vmem [thread:$0]  %s36, 128, %s38, [#allocation7], 64, 64, 4
    $region9: #{feedforward.1} parent=1 // pred_fallthru
      _
    // Predicated region
    $region10: #{feedforward.1} parent=1 // pred_check
      _
    $region11: #{feedforward.1} parent=1 // pred_check_branch
      %45 = sbr.rel (0) target = $region13
    $region12: #{feedforward.1} parent=1 // pred_region
      _
    $region13: #{feedforward.1} parent=1 // pred_fallthru
      _
    // Predicated region
    $region14: #{feedforward.1} parent=1 // pred_check
      _
    $region15: #{feedforward.1} parent=1 // pred_check_branch
      %47 = sbr.rel (0) target = $region17
    $region16: #{feedforward.1} parent=1 // pred_region
      %49 = vsyncadd [#allocation7], 0
      %s50 = sshll.u32 %s3, 4
      %s51 = int_to_ptr.hbm [resolvable:$true] %s50
      %s52 = sshll.u32 [#allocation8], 4
      %s53 = int_to_ptr.vmem [resolvable:$true] %s52
      %58 = dma.hbm_to_vmem [thread:$0]  %s51, 1024, %s53, [#allocation7], 64, 64, 4
    $region17: #{feedforward.1} parent=1 // pred_fallthru
      _
    // Predicated region
    $region18: #{feedforward.1} parent=1 // pred_check
      _
    $region19: #{feedforward.1} parent=1 // pred_check_branch
      %60 = sbr.rel (0) target = $region21
    $region20: #{feedforward.1} parent=1 // pred_region
      _
    $region21: #{feedforward.1} parent=1 // pred_fallthru
      _
    // Predicated region
    $region22: #{feedforward.1} parent=1 // pred_check
      _
    $region23: #{feedforward.1} parent=1 // pred_check_branch
      %62 = sbr.rel (0) target = $region25
    $region24: #{feedforward.1} parent=1 // pred_region
      %64 = vsyncadd [#allocation10], 0
      %s65 = sshll.u32 %s5, 4
      %s66 = int_to_ptr.hbm [resolvable:$true] %s65
      %s67 = sshll.u32 [#allocation9], 4
      %s68 = int_to_ptr.vmem [resolvable:$true] %s67
      %73 = dma.hbm_to_vmem [thread:$0]  %s66, 1024, %s68, [#allocation10], 64, 64, 4
    $region25: #{feedforward.1} parent=1 // pred_fallthru
      _
    // Predicated region
    $region26: #{feedforward.1} parent=1 // pred_check
      _
    $region27: #{feedforward.1} parent=1 // pred_check_branch
      %75 = sbr.rel (0) target = $region29
    $region28: #{feedforward.1} parent=1 // pred_region
      _
    $region29: #{feedforward.1} parent=1 // pred_fallthru
      _
    // Predicated region
    $region30: #{feedforward.1} parent=1 // pred_check
      _
    $region31: #{feedforward.1} parent=1 // pred_check_branch
      %77 = sbr.rel (0) target = $region33
    $region32: #{feedforward.1} parent=1 // pred_region
      _
    $region33: #{feedforward.1} parent=1 // pred_fallthru
      _
    // Predicated region
    $region34: #{feedforward.1} parent=1 // pred_check
      _
    $region35: #{feedforward.1} parent=1 // pred_check_branch
      %79 = sbr.rel (0) target = $region37
    $region36: #{feedforward.1} parent=1 // pred_region
      _
    $region37: #{feedforward.1} parent=1 // pred_fallthru
      _
    // Predicated region
    $region38: #{feedforward.1} parent=1 // pred_check
      _
    $region39: #{feedforward.1} parent=1 // pred_check_branch
      %81 = sbr.rel (0) target = $region41
    $region40: #{feedforward.1} parent=1 // pred_region
      %83 = dma.done [#allocation4], 128
    $region41: #{feedforward.1} parent=1 // pred_fallthru
      _
    // Predicated region
    $region42: #{feedforward.1} parent=1 // pred_check
      _
    $region43: #{feedforward.1} parent=1 // pred_check_branch
      %85 = sbr.rel (0) target = $region45
    $region44: #{feedforward.1} parent=1 // pred_region
      %87 = dma.done [#allocation7], 128
    $region45: #{feedforward.1} parent=1 // pred_fallthru
      _
    // Predicated region
    $region46: #{feedforward.1} parent=1 // pred_check
      _
    $region47: #{feedforward.1} parent=1 // pred_check_branch
      %89 = sbr.rel (0) target = $region49
    $region48: #{feedforward.1} parent=1 // pred_region
      %91 = dma.done [#allocation7], 1024
    $region49: #{feedforward.1} parent=1 // pred_fallthru
      _
    // Predicated region
    $region50: #{feedforward.1} parent=1 // pred_check
      _
    $region51: #{feedforward.1} parent=1 // pred_check_branch
      %93 = sbr.rel (0) target = $region53
    $region52: #{feedforward.1} parent=1 // pred_region
      %95 = dma.done [#allocation10], 1024
    $region53: #{feedforward.1} parent=1 // pred_fallthru
      _
    %v97 = vld [vmem:[#allocation3] sm:$0xff]
    %v98 = vpack.c.bf16 %v97, %v97
    %v99 = vld [vmem:[#allocation6] sm:$0xf]
    %v100 = vld [vmem:[#allocation6 + $0x4] sm:$0xf]
    %v101 = vld [vmem:[%s2] sm:$0x1]
    %v103 = vperm.slane %v101, 0
    %v107 = vunpack.c.l.b16 %v99
    %v108 = vunpack.c.l.b16 %v100
    %v109 = vpack.c.b16 %v108, %v107
    %vm111 = vcmask 130048
    %v113 = vsel %vm111, %v98, 0
    %115 = vmatpush.bf16.msra.mxu0 0
    %116 = vmatpush.bf16.msra.mxu0 0
    %117 = vmatpush.bf16.msra.mxu0 0
    %118 = vmatpush.bf16.msra.mxu0 0
    %119 = vmatpush.bf16.msra.mxu0 0
    %120 = vmatpush.bf16.msra.mxu0 0
    %121 = vmatpush.bf16.msra.mxu0 0
    %122 = vmatpush.bf16.msra.mxu0 %v109
    %123 = vmatmul.bf16.gmra.mxu0 %v113
    %v124 = vpop.f32.mrf.mxu0
    %v125 = vadd.f32 %v103, %v124
    %v126 = vpop.f32.mrf.mxu0
    %127 = vdwg.mxu0
    %v128 = vmax.f32 %v125, 0.0
    %v129 = vpack.c.bf16 %v128, %v128
    %v130 = vld [vmem:[#allocation8] sm:$0xf]
    %v131 = vld [vmem:[#allocation8 + $0x4] sm:$0xf]
    %v132 = vld [vmem:[#allocation8 + $0x8] sm:$0xf]
    %v133 = vld [vmem:[#allocation8 + $0xc] sm:$0xf]
    %v134 = vld [vmem:[#allocation8 + $0x10] sm:$0xf]
    %v135 = vld [vmem:[#allocation8 + $0x14] sm:$0xf]
    %v136 = vld [vmem:[#allocation8 + $0x18] sm:$0xf]
    %v137 = vld [vmem:[#allocation8 + $0x1c] sm:$0xf]
    %v138 = vld [vmem:[#allocation8 + $0x20] sm:$0xf]
    %v139 = vld [vmem:[#allocation8 + $0x24] sm:$0xf]
    %v140 = vld [vmem:[#allocation8 + $0x28] sm:$0xf]
    %v141 = vld [vmem:[#allocation8 + $0x2c] sm:$0xf]
    %v142 = vld [vmem:[#allocation8 + $0x30] sm:$0xf]
    %v143 = vld [vmem:[#allocation8 + $0x34] sm:$0xf]
    %v144 = vld [vmem:[#allocation8 + $0x38] sm:$0xf]
    %v145 = vld [vmem:[#allocation8 + $0x3c] sm:$0xf]
    %v146 = vld [vmem:[%s4] sm:$0x1]
    %v148 = vperm.slane %v146, 0
    %v166 = vunpack.c.l.b16 %v130
    %v167 = vunpack.c.l.b16 %v131
    %v168 = vunpack.c.l.b16 %v132
    %v169 = vunpack.c.l.b16 %v133
    %v170 = vunpack.c.l.b16 %v134
    %v171 = vunpack.c.l.b16 %v135
    %v172 = vunpack.c.l.b16 %v136
    %v173 = vunpack.c.l.b16 %v137
    %v174 = vunpack.c.l.b16 %v138
    %v175 = vunpack.c.l.b16 %v139
    %v176 = vunpack.c.l.b16 %v140
    %v177 = vunpack.c.l.b16 %v141
    %v178 = vunpack.c.l.b16 %v142
    %v179 = vunpack.c.l.b16 %v143
    %v180 = vunpack.c.l.b16 %v144
    %v181 = vunpack.c.l.b16 %v145
    %v182 = vpack.c.b16 %v167, %v166
    %v183 = vpack.c.b16 %v169, %v168
    %v184 = vpack.c.b16 %v171, %v170
    %v185 = vpack.c.b16 %v173, %v172
    %v186 = vpack.c.b16 %v175, %v174
    %v187 = vpack.c.b16 %v177, %v176
    %v188 = vpack.c.b16 %v179, %v178
    %v189 = vpack.c.b16 %v181, %v180
    %198 = vmatpush.bf16.msra.mxu0 %v189
    %199 = vmatpush.bf16.msra.mxu0 %v188
    %200 = vmatpush.bf16.msra.mxu0 %v187
    %201 = vmatpush.bf16.msra.mxu0 %v186
    %202 = vmatpush.bf16.msra.mxu0 %v185
    %203 = vmatpush.bf16.msra.mxu0 %v184
    %204 = vmatpush.bf16.msra.mxu0 %v183
    %205 = vmatpush.bf16.msra.mxu0 %v182
    %206 = vmatmul.bf16.gmra.mxu0 %v129
    %v207 = vpop.f32.mrf.mxu0
    %v208 = vadd.f32 %v148, %v207
    %v209 = vpop.f32.mrf.mxu0
    %210 = vdwg.mxu0
    %v211 = vmax.f32 %v208, 0.0
    %v212 = vpack.c.bf16 %v211, %v211
    %v213 = vld [vmem:[#allocation9] sm:$0xf]
    %v214 = vld [vmem:[#allocation9 + $0x4] sm:$0xf]
    %v215 = vld [vmem:[#allocation9 + $0x8] sm:$0xf]
    %v216 = vld [vmem:[#allocation9 + $0xc] sm:$0xf]
    %v217 = vld [vmem:[#allocation9 + $0x10] sm:$0xf]
    %v218 = vld [vmem:[#allocation9 + $0x14] sm:$0xf]
    %v219 = vld [vmem:[#allocation9 + $0x18] sm:$0xf]
    %v220 = vld [vmem:[#allocation9 + $0x1c] sm:$0xf]
    %v221 = vld [vmem:[#allocation9 + $0x20] sm:$0xf]
    %v222 = vld [vmem:[#allocation9 + $0x24] sm:$0xf]
    %v223 = vld [vmem:[#allocation9 + $0x28] sm:$0xf]
    %v224 = vld [vmem:[#allocation9 + $0x2c] sm:$0xf]
    %v225 = vld [vmem:[#allocation9 + $0x30] sm:$0xf]
    %v226 = vld [vmem:[#allocation9 + $0x34] sm:$0xf]
    %v227 = vld [vmem:[#allocation9 + $0x38] sm:$0xf]
    %v228 = vld [vmem:[#allocation9 + $0x3c] sm:$0xf]
    %v229 = vld [vmem:[%s6] sm:$0x1]
    %v231 = vperm.slane %v229, 0
    %v249 = vunpack.c.l.b16 %v213
    %v250 = vunpack.c.l.b16 %v214
    %v251 = vunpack.c.l.b16 %v215
    %v252 = vunpack.c.l.b16 %v216
    %v253 = vunpack.c.l.b16 %v217
    %v254 = vunpack.c.l.b16 %v218
    %v255 = vunpack.c.l.b16 %v219
    %v256 = vunpack.c.l.b16 %v220
    %v257 = vunpack.c.l.b16 %v221
    %v258 = vunpack.c.l.b16 %v222
    %v259 = vunpack.c.l.b16 %v223
    %v260 = vunpack.c.l.b16 %v224
    %v261 = vunpack.c.l.b16 %v225
    %v262 = vunpack.c.l.b16 %v226
    %v263 = vunpack.c.l.b16 %v227
    %v264 = vunpack.c.l.b16 %v228
    %v265 = vpack.c.b16 %v250, %v249
    %v266 = vpack.c.b16 %v252, %v251
    %v267 = vpack.c.b16 %v254, %v253
    %v268 = vpack.c.b16 %v256, %v255
    %v269 = vpack.c.b16 %v258, %v257
    %v270 = vpack.c.b16 %v260, %v259
    %v271 = vpack.c.b16 %v262, %v261
    %v272 = vpack.c.b16 %v264, %v263
    %281 = vmatpush.bf16.msra.mxu0 %v272
    %282 = vmatpush.bf16.msra.mxu0 %v271
    %283 = vmatpush.bf16.msra.mxu0 %v270
    %284 = vmatpush.bf16.msra.mxu0 %v269
    %285 = vmatpush.bf16.msra.mxu0 %v268
    %286 = vmatpush.bf16.msra.mxu0 %v267
    %287 = vmatpush.bf16.msra.mxu0 %v266
    %288 = vmatpush.bf16.msra.mxu0 %v265
    %289 = vmatmul.bf16.gmra.mxu0 %v212
    %v290 = vpop.f32.mrf.mxu0
    %v291 = vadd.f32 %v231, %v290
    %v292 = vpop.f32.mrf.mxu0
    %293 = vdwg.mxu0
    %v294 = vmax.f32 %v291, 0.0
    %v295 = vld [vmem:[%s7] sm:$0x1]
    %v296 = vunpack.c.l.bf16 %v295
    %v297 = vperm.slane %v296, 0
    %v298 = vmul.f32 %v294, %v297
    %299 = vadd.xlane.f32.xlu0 %v298
    %v300 = vpop.xlane.xlu0 %299
    %v301 = vld [vmem:[#allocation2] sm:$0x1]
    %303 = vset.pattern.permute.xlu0 0
    %304 = vperm.xlu0 %303, %v301
    %v305 = vpop.permute.xlu0 %304
    %v307 = vperm.slane %v305, 0
    %v308 = vadd.f32 %v300, %v307
    %v309 = vxor.u32 %v308, 2147483648
    %v310 = vmul.f32 %v309, 1.442695
    %v311 = vpow.pop %v310
    %v312 = vadd.f32 %v311, 1.0
    %v313 = vrcp.pop %v312
    %v314 = vmul.f32 %v312, %v313
    %v315 = vsub.f32 1.0, %v314
    %v316 = vmul.f32 %v313, %v315
    %v317 = vadd.f32 %v313, %v316
    %vm318 = vweird.f32 %v312
    %vm319 = vweird.f32 %v313
    %vm320 = vmor %vm318, %vm319
    %v321 = vsel %vm320, %v313, %v317
    %v322 = vand.u32 2147483647, %v312
    %vm323 = vcmp.eq.f32.partialorder %v322, 8.507059e+37
    %v324 = vand.u32 %v312, 2147483648
    %v325 = vor.u32 1.1754944e-38, %v324
    %v326 = vsel %vm323, %v325, %v321
    %v327 = vmul.f32 1.0, %v326
    %v329 = vlaneseq
    %v330 = vand.u32 %v329, 127
    %v331 = vperm.slane %v327, %v330
    %vm333 = vcmask 57344
    %334 = vst.msk [vmem:[#allocation11] sm:$0x1] %vm333, %v331
    // Predicated region
    $region54: #{feedforward.1} parent=1 // pred_check
      _
    $region55: #{feedforward.1} parent=1 // pred_check_branch
      %336 = sbr.rel (0) target = $region57
    $region56: #{feedforward.1} parent=1 // pred_region
      %338 = vsyncadd [#allocation5], 0
      %s340 = sshll.u32 [#allocation11], 4
      %s341 = int_to_ptr.vmem [resolvable:$true] %s340
      %s342 = sshll.u32 %s9, 4
      %s343 = int_to_ptr.hbm [resolvable:$true] %s342
      %345 = dma.vmem_to_hbm [thread:$0]  %s341, 16, %s343, [#allocation5]
    $region57: #{feedforward.1} parent=1 // pred_fallthru
      _
    // Predicated region
    $region58: #{feedforward.1} parent=1 // pred_check
      _
    $region59: #{feedforward.1} parent=1 // pred_check_branch
      %347 = sbr.rel (0) target = $region61
    $region60: #{feedforward.1} parent=1 // pred_region
      %349 = dma.done [#allocation5], 16
    $region61: #{feedforward.1} parent=1 // pred_fallthru
      _
    %350 = vsyncpa [#allocation4], 1
    %351 = vsyncpa [#allocation7], 1
    %352 = vsyncpa [#allocation10], 1
    %353 = vsyncpa [#allocation5], 1

</llo_original>
